<compile_context>
chip_gen: v6e
topology: v6e:2x2x1
jax: 0.10.0
libtpu: 0.0.40
codegen_flags: <defaults>
</compile_context>

<pallas_src>
import functools
import math

import jax
import jax.numpy as jnp
from jax.experimental import pallas as pl
from jax.experimental.pallas import tpu as pltpu

_LANE = 128
_SUBLANE = 8
_XLA_FALLBACK_FLOPS = 1 << 23  # below this, XLA's fused dot beats Pallas launch overhead


def _round_up(x: int, m: int) -> int:
    return ((x + m - 1) // m) * m


@functools.lru_cache(maxsize=None)
def _tile_caps():
    """(tm_cap, tn_cap, tk_cap, vmem_budget_bytes) chosen per TPU generation."""
    try:
        vmem = pltpu.get_tpu_info().vmem_capacity_bytes
    except Exception:
        vmem = 64 << 20  # be conservative if the query is unavailable
    if vmem >= (100 << 20):
        # v5e / v6e class: 128 MiB VMEM -> large output tiles to reach the MXU roofline.
        return 1024, 1024, 512, 100 << 20
    # v7x class: 64 MiB VMEM per TC, ~3.2 TB/s HBM -> 512 tiles already saturate the MXU.
    return 512, 512, 512, 56 << 20


def _pick_tile(dim: int, cap: int, align: int) -> int:
    """Tile size that is (align)-aligned and minimizes padding of `dim`."""
    dim = max(dim, 1)
    if dim <= cap:
        return _round_up(dim, align)
    cands = []
    c = cap
    while c >= 128:
        cands.append(c)
        c //= 2
    # least padding; ties broken toward the larger tile (better arithmetic intensity)
    return min(cands, key=lambda t: (_round_up(dim, t) - dim, -t))


# ---------------------------------------------------------------------------
# Kernels: acc(f32) += x_tile(tm,tk) @ w_tile(tk,tn); finalize on last K step.
# ---------------------------------------------------------------------------
def _matmul_bias_kernel(x_ref, w_ref, b_ref, o_ref, acc_ref):
    k = pl.program_id(2)

    @pl.when(k == 0)
    def _():
        acc_ref[...] = jnp.zeros_like(acc_ref)

    acc_ref[...] += jnp.dot(x_ref[...], w_ref[...], preferred_element_type=jnp.float32)

    @pl.when(k == pl.num_programs(2) - 1)
    def _():
        o_ref[...] = (acc_ref[...] + b_ref[...]).astype(o_ref.dtype)


def _matmul_kernel(x_ref, w_ref, o_ref, acc_ref):
    k = pl.program_id(2)

    @pl.when(k == 0)
    def _():
        acc_ref[...] = jnp.zeros_like(acc_ref)

    acc_ref[...] += jnp.dot(x_ref[...], w_ref[...], preferred_element_type=jnp.float32)

    @pl.when(k == pl.num_programs(2) - 1)
    def _():
        o_ref[...] = acc_ref[...].astype(o_ref.dtype)


# ---------------------------------------------------------------------------
# One-time parameter preparation (amortized across forward calls).
# ---------------------------------------------------------------------------
def prepare_multilinear_params(weight, bias=None, *, compute_dtype=None):
    """Transpose nn.Linear weight (N, K) -> (Kp, Np), zero-pad to the tile grid,
    optionally cast to `compute_dtype` (e.g. bf16); bias -> padded (1, Np) float32.
    Do this once at parameter setup; pass the results with `prepared=True`."""
    N, K = weight.shape
    _, tn_cap, tk_cap, _ = _tile_caps()
    tn = _pick_tile(N, tn_cap, _LANE)
    tk = _pick_tile(K, tk_cap, _LANE)
    Np, Kp = _round_up(N, tn), _round_up(K, tk)

    w = weight if compute_dtype is None else weight.astype(compute_dtype)
    w_kn = w.T  # (K, N): kernel uses a plain dot, no transposed-RHS read
    if (Kp, Np) != (K, N):
        w_kn = jnp.pad(w_kn, ((0, Kp - K), (0, Np - N)))

    b2d = None
    if bias is not None:
        b2d = bias.astype(jnp.float32).reshape(1, N)
        if Np != N:
            b2d = jnp.pad(b2d, ((0, 0), (0, Np - N)))
    return w_kn, b2d


# ---------------------------------------------------------------------------
# Tiled linear: y = x2d @ w_kn (+ b2d), w_kn already (Kp, Np) padded.
# ---------------------------------------------------------------------------
def _tiled_linear(x2d, w_kn, b2d, out_dtype):
    M, K = x2d.shape
    Kp, Np = w_kn.shape

    tm_cap, tn_cap, tk_cap, vmem_budget = _tile_caps()
    tm = _pick_tile(M, tm_cap, _SUBLANE)
    tn = _pick_tile(Np, tn_cap, _LANE)
    tk = _pick_tile(Kp, tk_cap, _LANE)
    assert Np % tn == 0 and Kp % tk == 0

    Mp = _round_up(M, tm)
    # Only pad activations when the tile grid requires it (weight/bias already padded).
    if (Mp, Kp) != (M, K):
        x2d = jnp.pad(x2d, ((0, Mp - M), (0, Kp - K)))

    grid = (Mp // tm, Np // tn, Kp // tk)

    in_specs = [
        pl.BlockSpec((tm, tk), lambda i, j, k: (i, k)),  # activations
        pl.BlockSpec((tk, tn), lambda i, j, k: (k, j)),  # weight, (K, N) layout
    ]
    out_spec = pl.BlockSpec((tm, tn), lambda i, j, k: (i, j))
    scratch = [pltpu.VMEM((tm, tn), jnp.float32)]

    x_isz = jnp.dtype(x2d.dtype).itemsize
    w_isz = jnp.dtype(w_kn.dtype).itemsize
    o_isz = jnp.dtype(out_dtype).itemsize

    vmem_need = (
        2 * (tm * tk * x_isz + tk * tn * w_isz + tm * tn * o_isz)  # double-buffered tiles
        + tm * tn * 4                                              # f32 accumulator
        + (2 * tn * 4 if b2d is not None else 0)                   # bias tiles
    )
    vmem_limit = int(min(max(2 * vmem_need, 32 << 20), vmem_budget))

    cparams = pltpu.CompilerParams(
        dimension_semantics=("parallel", "parallel", "arbitrary"),
        vmem_limit_bytes=vmem_limit,
    )
    # Account for the K-loop re-reads of x and W (per the perf review).
    cost = pl.CostEstimate(
        flops=2 * Mp * Np * Kp,
        transcendentals=0,
        bytes_accessed=(
            Mp * Kp * (Np // tn) * x_isz
            + Np * Kp * (Mp // tm) * w_isz
            + Mp * Np * o_isz
            + (Np * 4 if b2d is not None else 0)
        ),
    )

    if b2d is None:
        out = pl.pallas_call(
            _matmul_kernel,
            out_shape=jax.ShapeDtypeStruct((Mp, Np), out_dtype),
            grid=grid,
            in_specs=in_specs,
            out_specs=out_spec,
            scratch_shapes=scratch,
            compiler_params=cparams,
            cost_estimate=cost,
        )(x2d, w_kn)
    else:
        out = pl.pallas_call(
            _matmul_bias_kernel,
            out_shape=jax.ShapeDtypeStruct((Mp, Np), out_dtype),
            grid=grid,
            in_specs=in_specs + [pl.BlockSpec((1, tn), lambda i, j, k: (0, j))],
            out_specs=out_spec,
            scratch_shapes=scratch,
            compiler_params=cparams,
            cost_estimate=cost,
        )(x2d, w_kn, b2d)
    return out


# ---------------------------------------------------------------------------
# Public forward (matches Multilinear.forward semantics).
# ---------------------------------------------------------------------------
def multilinear_forward(x, weight, bias, in_size, out_size, *,
                        prepared=False, compute_dtype=None, force_pallas=False):
    """x: (..., *in_size).  If prepared=False: weight (out_features, in_features),
    bias (out_features,) or None (nn.Linear convention).  If prepared=True: pass the
    outputs of prepare_multilinear_params (amortizes the transpose/pad/cast)."""
    in_size = (in_size,) if isinstance(in_size, int) else tuple(in_size)
    out_size = (out_size,) if isinstance(out_size, int) else tuple(out_size)
    in_features = math.prod(in_size)
    out_features = math.prod(out_size)

    batch_shape = x.shape[: x.ndim - len(in_size)]
    m = math.prod(batch_shape) if batch_shape else 1
    out_dtype = x.dtype

    x2d = x.reshape((m, in_features))
    flops = 2 * m * in_features * out_features

    if not force_pallas and flops < _XLA_FALLBACK_FLOPS:
        # Tiny matmul: per-grid-step overhead and 128-lane padding dominate; XLA wins.
        if prepared:
            w_kn, b2d = weight, bias
            out2d = jnp.dot(x2d.astype(w_kn.dtype), w_kn[:in_features, :out_features],
                            preferred_element_type=jnp.float32)
            if b2d is not None:
                out2d = out2d + b2d[0, :out_features]
        else:
            w = weight if compute_dtype is None else weight.astype(compute_dtype)
            out2d = jnp.dot(x2d.astype(w.dtype), w.T, preferred_element_type=jnp.float32)
            if bias is not None:
                out2d = out2d + bias.astype(jnp.float32)
        out2d = out2d.astype(out_dtype)
    else:
        if not prepared:
            # Per-call prep (one transpose/pad pass). Call prepare_multilinear_params
            # once at setup and pass prepared=True to amortize it.
            weight, bias = prepare_multilinear_params(
                weight, bias, compute_dtype=(compute_dtype or x.dtype))
        w_kn, b2d = weight, bias
        if x2d.dtype != w_kn.dtype:
            x2d = x2d.astype(w_kn.dtype)
        out2d = _tiled_linear(x2d, w_kn, b2d, out_dtype)
        if out2d.shape != (m, out_features):
            out2d = out2d[:m, :out_features]

    return out2d.reshape(batch_shape + out_size)


def init_multilinear_params(key, in_size, out_size, dtype=jnp.float32):
    """Deterministic nn.Linear-style init (uniform +/- 1/sqrt(in_features))."""
    in_features = math.prod(in_size)
    out_features = math.prod(out_size)
    k_w, k_b = jax.random.split(key)
    bound = 1.0 / math.sqrt(in_features)
    weight = jax.random.uniform(k_w, (out_features, in_features), dtype=dtype,
                                minval=-bound, maxval=bound)
    bias = jax.random.uniform(k_b, (out_features,), dtype=dtype,
                              minval=-bound, maxval=bound)
    return weight, bias


if __name__ == "__main__":
    key = jax.random.PRNGKey(0)
    k_x, k_p = jax.random.split(key)

    # Multilinear(in_size=(4, 8), out_size=(2, 16)): in_features=32, out_features=32
    in_size = (4, 8)
    out_size = (2, 16)
    batch_shape = (2, 8)

    x = jax.random.normal(k_x, batch_shape + in_size, dtype=jnp.float32)
    weight, bias = init_multilinear_params(k_p, in_size, out_size)
    x2d = x.reshape(batch_shape + (math.prod(in_size),))

    # 1) Prepared-params + bias path, forced through the Pallas kernel.
    w_kn, b2d = prepare_multilinear_params(weight, bias)
    out = multilinear_forward(x, w_kn, b2d, in_size, out_size,
                              prepared=True, force_pallas=True)
    out = jax.block_until_ready(out)
    ref = (x2d @ weight.T + bias).reshape(batch_shape + out_size)
    assert out.shape == batch_shape + out_size
    assert jnp.allclose(out, ref, atol=1e-5, rtol=1e-5)

    # 2) Raw-params, no-bias path, forced through the Pallas kernel.
    out_nb = multilinear_forward(x, weight, None, in_size, out_size, force_pallas=True)
    out_nb = jax.block_until_ready(out_nb)
    ref_nb = (x2d @ weight.T).reshape(batch_shape + out_size)
    assert jnp.allclose(out_nb, ref_nb, atol=1e-5, rtol=1e-5)

    # 3) Default path (tiny shapes -> XLA fallback), same numerics.
    out_fb = jax.block_until_ready(multilinear_forward(x, weight, bias, in_size, out_size))
    assert jnp.allclose(out_fb, ref, atol=1e-5, rtol=1e-5)

    print("KERNEL_OK")
</pallas_src>

<mosaic_0001>
module attributes {stable_mosaic.version = 11 : i64} {
  func.func @_matmul_bias_kernel(%arg0: i32, %arg1: i32, %arg2: i32, %arg3: memref<16x128xf32, #tpu.memory_space<vmem>>, %arg4: memref<128x128xf32, #tpu.memory_space<vmem>>, %arg5: memref<1x128xf32, #tpu.memory_space<vmem>>, %arg6: memref<16x128xf32, #tpu.memory_space<vmem>>, %arg7: memref<16x128xf32, #tpu.memory_space<vmem>>) attributes {dimension_semantics = [#tpu.dimension_semantics<parallel>, #tpu.dimension_semantics<parallel>, #tpu.dimension_semantics<arbitrary>], iteration_bounds = array<i64: 1, 1, 1>, scalar_prefetch = 0 : i64, scratch_operands = 1 : i64, tpu.core_type = #tpu.core_type<tc>, window_params = [{transform_indices = @transform_0, window_bounds = array<i64: 16, 128>}, {transform_indices = @transform_1, window_bounds = array<i64: 128, 128>}, {transform_indices = @transform_2, window_bounds = array<i64: 1, 128>}, {transform_indices = @transform_3, window_bounds = array<i64: 16, 128>}]} {
    %c0_i32 = arith.constant 0 : i32
    %0 = arith.cmpi eq, %arg2, %c0_i32 : i32
    %1 = arith.extui %0 : i1 to i32
    %c0_i32_0 = arith.constant 0 : i32
    %2 = arith.cmpi ne, %1, %c0_i32_0 : i32
    scf.if %2 {
      %cst_10 = arith.constant 0.000000e+00 : f32
      %12 = vector.broadcast %cst_10 : f32 to vector<16x128xf32>
      %c0_11 = arith.constant 0 : index
      %c0_12 = arith.constant 0 : index
      %13 = vector.load %arg7[%c0_11, %c0_12] : memref<16x128xf32, #tpu.memory_space<vmem>>, vector<16x128xf32>
      tpu.vector_store %arg7[%c0_11, %c0_12], %12 {strides = array<i32>} : memref<16x128xf32, #tpu.memory_space<vmem>>, vector<16x128xf32>,
    } else {
    }
    %c0 = arith.constant 0 : index
    %c0_1 = arith.constant 0 : index
    %3 = vector.load %arg7[%c0, %c0_1] : memref<16x128xf32, #tpu.memory_space<vmem>>, vector<16x128xf32>
    %c0_2 = arith.constant 0 : index
    %c0_3 = arith.constant 0 : index
    %4 = vector.load %arg3[%c0_2, %c0_3] : memref<16x128xf32, #tpu.memory_space<vmem>>, vector<16x128xf32>
    %c0_4 = arith.constant 0 : index
    %c0_5 = arith.constant 0 : index
    %5 = vector.load %arg4[%c0_4, %c0_5] : memref<128x128xf32, #tpu.memory_space<vmem>>, vector<128x128xf32>
    %cst = arith.constant dense<0.000000e+00> : vector<16x128xf32>
    %6 = tpu.matmul %4, %5, %cst {dimension_numbers = #tpu.dot_dimension_numbers<[1], [0], [0], [1], [0, 0, 1, 1], [], []>} : vector<16x128xf32>, vector<128x128xf32>, vector<16x128xf32> -> vector<16x128xf32>
    %7 = arith.addf %3, %6 : vector<16x128xf32>
    %c0_6 = arith.constant 0 : index
    %c0_7 = arith.constant 0 : index
    %8 = vector.load %arg7[%c0_6, %c0_7] : memref<16x128xf32, #tpu.memory_space<vmem>>, vector<16x128xf32>
    tpu.vector_store %arg7[%c0_6, %c0_7], %7 {strides = array<i32>} : memref<16x128xf32, #tpu.memory_space<vmem>>, vector<16x128xf32>,
    %c0_i32_8 = arith.constant 0 : i32
    %9 = arith.cmpi eq, %arg2, %c0_i32_8 : i32
    %10 = arith.extui %9 : i1 to i32
    %c0_i32_9 = arith.constant 0 : i32
    %11 = arith.cmpi ne, %10, %c0_i32_9 : i32
    scf.if %11 {
      %c0_10 = arith.constant 0 : index
      %c0_11 = arith.constant 0 : index
      %12 = vector.load %arg7[%c0_10, %c0_11] : memref<16x128xf32, #tpu.memory_space<vmem>>, vector<16x128xf32>
      %c0_12 = arith.constant 0 : index
      %c0_13 = arith.constant 0 : index
      %13 = vector.load %arg5[%c0_12, %c0_13] : memref<1x128xf32, #tpu.memory_space<vmem>>, vector<1x128xf32>
      %14 = vector.broadcast %13 : vector<1x128xf32> to vector<16x128xf32>
      %15 = arith.addf %12, %14 : vector<16x128xf32>
      %c0_14 = arith.constant 0 : index
      %c0_15 = arith.constant 0 : index
      %16 = vector.load %arg6[%c0_14, %c0_15] : memref<16x128xf32, #tpu.memory_space<vmem>>, vector<16x128xf32>
      tpu.vector_store %arg6[%c0_14, %c0_15], %15 {strides = array<i32>} : memref<16x128xf32, #tpu.memory_space<vmem>>, vector<16x128xf32>,
    } else {
    }
    return
  }
  func.func @transform_0(%arg0: i32, %arg1: i32, %arg2: i32) -> (i32, i32) {
    %c0_i32 = arith.constant 0 : i32
    return %arg0, %arg2 : i32, i32
  }
  func.func @transform_1(%arg0: i32, %arg1: i32, %arg2: i32) -> (i32, i32) {
    %c0_i32 = arith.constant 0 : i32
    return %arg2, %arg1 : i32, i32
  }
  func.func @transform_2(%arg0: i32, %arg1: i32, %arg2: i32) -> (i32, i32) {
    %c0_i32 = arith.constant 0 : i32
    %c0_i32_0 = arith.constant 0 : i32
    return %c0_i32, %arg1 : i32, i32
  }
  func.func @transform_3(%arg0: i32, %arg1: i32, %arg2: i32) -> (i32, i32) {
    %c0_i32 = arith.constant 0 : i32
    return %arg0, %arg1 : i32, i32
  }
}

</mosaic_0001>

<llo_original>
// kernel: tpu_custom_call.1
$region0: #{tpu_custom_call.1}
  #allocation0 [shape = 'u32[]', space=smem, size = 0x4, offset = 0x4, fixed_abs, tag = 'smem constant byte address 0x4 - core index']
  #allocation1 [shape = 'u32[144,128]{1,0:T(1,128)}', space=vmem, size = 0x12000, scoped, tag = 'internal scratch']
  #allocation2 [shape = 'f32[16,128]{1,0:T(8,128)}', space=vmem, size = 0x2000, scoped, tag = 'scratch operand']
  %s0 = inlined_call_operand.hbm [shape: f32[16,128], index: 0, kind: input, shape index: {}]
  %s1 = inlined_call_operand.hbm [shape: f32[128,128], index: 1, kind: input, shape index: {}]
  %s2 = inlined_call_operand.vmem [shape: f32[1,128], index: 2, kind: input, shape index: {}]
  %s3 = inlined_call_operand.hbm [shape: f32[16,128], index: 3, kind: output, shape index: {}]
  %s4 = sld [smem:[#allocation0]]
  $region38: #{tpu_custom_call.1} parent=0
    _
  %s6 = ssub.s32 1, %s4
  %s7 = scalar_select 0, %s6, %s4
  $region1: #{tpu_custom_call.1} parent=0
    #allocation3 [shape = 'u8[8192]{0}', space=vmem, size = 0x2000, scoped, tag = 'input window, operand 0, single buffered']
    #allocation4 [shape = 's32[1]{0}', space=sflag, size = 0x4, scoped, tag = 'scoped memory for tpu_custom_call.1']
    #allocation5 [shape = 's32[1]{0}', space=sflag, size = 0x4, scoped, tag = 'scoped memory for tpu_custom_call.1']
    #allocation6 [shape = 'u8[65536]{0}', space=vmem, size = 0x10000, scoped, tag = 'input window, operand 1, single buffered']
    #allocation7 [shape = 's32[1]{0}', space=sflag, size = 0x4, scoped, tag = 'scoped memory for tpu_custom_call.1']
    #allocation8 [shape = 'u8[8192]{0}', space=vmem, size = 0x2000, scoped, tag = 'output window, operand 0, single buffered']
    %8 = vsyncpa [#allocation4], 0
    %9 = vsyncpa [#allocation7], 0
    %10 = vsyncpa [#allocation5], 0
    // Predicated region
    $region2: #{tpu_custom_call.1} parent=1 // pred_check
      _
    $region3: #{tpu_custom_call.1} parent=1 // pred_check_branch
      %12 = sbr.rel (0) target = $region5
    $region4: #{tpu_custom_call.1} parent=1 // pred_region
      %s14 = ssub.s32 256, 256
      %15 = vsyncadd [#allocation4], %s14
      %s16 = sshll.u32 [#allocation3], 4
      %s17 = int_to_ptr.vmem [resolvable:$true] %s16
      %22 = dma.hbm_to_vmem [thread:$0]  %s0, 256, %s17, [#allocation4], 128, 128, 8
    $region5: #{tpu_custom_call.1} parent=1 // pred_fallthru
      _
    // Predicated region
    $region6: #{tpu_custom_call.1} parent=1 // pred_check
      _
    $region7: #{tpu_custom_call.1} parent=1 // pred_check_branch
      %24 = sbr.rel (0) target = $region9
    $region8: #{tpu_custom_call.1} parent=1 // pred_region
      %s26 = ssub.s32 2048, 2048
      %27 = vsyncadd [#allocation7], %s26
      %s28 = sshll.u32 [#allocation6], 4
      %s29 = int_to_ptr.vmem [resolvable:$true] %s28
      %34 = dma.hbm_to_vmem [thread:$0]  %s1, 2048, %s29, [#allocation7], 128, 128, 8
    $region9: #{tpu_custom_call.1} parent=1 // pred_fallthru
      _
    // Predicated region
    $region10: #{tpu_custom_call.1} parent=1 // pred_check
      _
    $region11: #{tpu_custom_call.1} parent=1 // pred_check_branch
      %36 = sbr.rel (0) target = $region13
    $region12: #{tpu_custom_call.1} parent=1 // pred_region
      _
    $region13: #{tpu_custom_call.1} parent=1 // pred_fallthru
      _
    // Predicated region
    $region14: #{tpu_custom_call.1} parent=1 // pred_check
      _
    $region15: #{tpu_custom_call.1} parent=1 // pred_check_branch
      %38 = sbr.rel (0) target = $region17
    $region16: #{tpu_custom_call.1} parent=1 // pred_region
      %39 = dma.done [#allocation4], 256
    $region17: #{tpu_custom_call.1} parent=1 // pred_fallthru
      _
    // Predicated region
    $region18: #{tpu_custom_call.1} parent=1 // pred_check
      _
    $region19: #{tpu_custom_call.1} parent=1 // pred_check_branch
      %41 = sbr.rel (0) target = $region21
    $region20: #{tpu_custom_call.1} parent=1 // pred_region
      %42 = dma.done [#allocation7], 2048
    $region21: #{tpu_custom_call.1} parent=1 // pred_fallthru
      _
    %p43 = scmp.eq.s32.totalorder 0, 0
    // Predicated region
    $region22: #{tpu_custom_call.1} parent=1 // pred_check
      %p44 = pneg %p43
    $region23: #{tpu_custom_call.1} parent=1 // pred_check_branch
      %46 = sbr.rel (%p44) target = $region25
    $region24: #{tpu_custom_call.1} parent=1 // pred_region
      %47 = vst [vmem:[#allocation2] sm:$0xff] 0.0
      %48 = vst [vmem:[#allocation2 + $0x8] sm:$0xff] 0.0
    $region25: #{tpu_custom_call.1} parent=1 // pred_fallthru
      _
    %v49 = vld [vmem:[#allocation2] sm:$0xff]
    %v50 = vld [vmem:[#allocation2 + $0x8] sm:$0xff]
    %v51 = vld [vmem:[#allocation3] sm:$0xff]
    %v52 = vld [vmem:[#allocation3 + $0x8] sm:$0xff]
    %v53 = vld [vmem:[#allocation6] sm:$0xff]
    %v54 = vld [vmem:[#allocation6 + $0x8] sm:$0xff]
    %v55 = vld [vmem:[#allocation6 + $0x10] sm:$0xff]
    %v56 = vld [vmem:[#allocation6 + $0x18] sm:$0xff]
    %v57 = vld [vmem:[#allocation6 + $0x20] sm:$0xff]
    %v58 = vld [vmem:[#allocation6 + $0x28] sm:$0xff]
    %v59 = vld [vmem:[#allocation6 + $0x30] sm:$0xff]
    %v60 = vld [vmem:[#allocation6 + $0x38] sm:$0xff]
    %v61 = vld [vmem:[#allocation6 + $0x40] sm:$0xff]
    %v62 = vld [vmem:[#allocation6 + $0x48] sm:$0xff]
    %v63 = vld [vmem:[#allocation6 + $0x50] sm:$0xff]
    %v64 = vld [vmem:[#allocation6 + $0x58] sm:$0xff]
    %v65 = vld [vmem:[#allocation6 + $0x60] sm:$0xff]
    %v66 = vld [vmem:[#allocation6 + $0x68] sm:$0xff]
    %v67 = vld [vmem:[#allocation6 + $0x70] sm:$0xff]
    %v68 = vld [vmem:[#allocation6 + $0x78] sm:$0xff]
    %69 = vmatprep.subr.mxu0 0.0
    %70 = vmatpush1.msra.mxu0 %v68
    %71 = vmatprep.subr.mxu0 0.0
    %72 = vmatpush1.msra.mxu0 %v67
    %73 = vmatprep.subr.mxu0 0.0
    %74 = vmatpush1.msra.mxu0 %v66
    %75 = vmatprep.subr.mxu0 0.0
    %76 = vmatpush1.msra.mxu0 %v65
    %77 = vmatprep.subr.mxu0 0.0
    %78 = vmatpush1.msra.mxu0 %v64
    %79 = vmatprep.subr.mxu0 0.0
    %80 = vmatpush1.msra.mxu0 %v63
    %81 = vmatprep.subr.mxu0 0.0
    %82 = vmatpush1.msra.mxu0 %v62
    %83 = vmatprep.subr.mxu0 0.0
    %84 = vmatpush1.msra.mxu0 %v61
    %85 = vmatprep.subr.mxu0 0.0
    %86 = vmatpush1.msra.mxu0 %v60
    %87 = vmatprep.subr.mxu0 0.0
    %88 = vmatpush1.msra.mxu0 %v59
    %89 = vmatprep.subr.mxu0 0.0
    %90 = vmatpush1.msra.mxu0 %v58
    %91 = vmatprep.subr.mxu0 0.0
    %92 = vmatpush1.msra.mxu0 %v57
    %93 = vmatprep.subr.mxu0 0.0
    %94 = vmatpush1.msra.mxu0 %v56
    %95 = vmatprep.subr.mxu0 0.0
    %96 = vmatpush1.msra.mxu0 %v55
    %97 = vmatprep.subr.mxu0 0.0
    %98 = vmatpush1.msra.mxu0 %v54
    %99 = vmatprep.subr.mxu0 0.0
    %100 = vmatpush1.msra.mxu0 %v53
    %101 = vmatprep.subr.mxu0 0.0
    %102 = vmatpush2.msra.mxu0 0.0
    %103 = vmatprep.subr.mxu0 0.0
    %104 = vmatpush2.msra.mxu0 0.0
    %105 = vmatprep.subr.mxu0 0.0
    %106 = vmatpush2.msra.mxu0 0.0
    %107 = vmatprep.subr.mxu0 0.0
    %108 = vmatpush2.msra.mxu0 0.0
    %109 = vmatprep.subr.mxu0 0.0
    %110 = vmatpush2.msra.mxu0 0.0
    %111 = vmatprep.subr.mxu0 0.0
    %112 = vmatpush2.msra.mxu0 0.0
    %113 = vmatprep.subr.mxu0 0.0
    %114 = vmatpush2.msra.mxu0 0.0
    %115 = vmatprep.subr.mxu0 0.0
    %116 = vmatpush2.msra.mxu0 0.0
    %117 = vmatprep.subr.mxu0 0.0
    %118 = vmatpush2.msra.mxu0 0.0
    %119 = vmatprep.subr.mxu0 0.0
    %120 = vmatpush2.msra.mxu0 0.0
    %121 = vmatprep.subr.mxu0 0.0
    %122 = vmatpush2.msra.mxu0 0.0
    %123 = vmatprep.subr.mxu0 0.0
    %124 = vmatpush2.msra.mxu0 0.0
    %125 = vmatprep.subr.mxu0 0.0
    %126 = vmatpush2.msra.mxu0 0.0
    %127 = vmatprep.subr.mxu0 0.0
    %128 = vmatpush2.msra.mxu0 0.0
    %129 = vmatprep.subr.mxu0 0.0
    %130 = vmatpush2.msra.mxu0 0.0
    %131 = vmatprep.subr.mxu0 0.0
    %132 = vmatpush2.msra.mxu0 0.0
    %133 = vmatprep.mubr.f32.mxu0 0.0
    %134 = vmatmul.mubr.f32.gmra.mxu0 %v51
    %v135 = vpop.f32.mrf.mxu0
    %v136 = vadd.f32 0.0, %v135
    %v137 = vpop.f32.mrf.mxu0
    %138 = vmatprep.mubr.f32.mxu0 0.0
    %139 = vmatmul.mubr.f32.gmra.mxu0 %v52
    %v140 = vpop.f32.mrf.mxu0
    %v141 = vadd.f32 0.0, %v140
    %v142 = vpop.f32.mrf.mxu0
    %143 = vdwg.mxu0
    %v144 = vadd.f32 %v49, %v136
    %v145 = vadd.f32 %v50, %v141
    %146 = vst [vmem:[#allocation2] sm:$0xff] %v144
    %147 = vst [vmem:[#allocation2 + $0x8] sm:$0xff] %v145
    // Predicated region
    $region26: #{tpu_custom_call.1} parent=1 // pred_check
      %p148 = pneg %p43
    $region27: #{tpu_custom_call.1} parent=1 // pred_check_branch
      %150 = sbr.rel (%p148) target = $region29
    $region28: #{tpu_custom_call.1} parent=1 // pred_region
      %v151 = vld [vmem:[#allocation2] sm:$0xff]
      %v152 = vld [vmem:[#allocation2 + $0x8] sm:$0xff]
      %v153 = vld [vmem:[%s2] sm:$0x1]
      %v155 = vlaneseq
      %v156 = vshrl.u32 %v155, 7
      %v157 = vsub.s32 0, %v156
      %v158 = vrot.slane %v153, %v157
      %v160 = vadd.f32 %v151, %v158
      %v161 = vadd.f32 %v152, %v158
      %162 = vst [vmem:[#allocation8] sm:$0xff] %v160
      %163 = vst [vmem:[#allocation8 + $0x8] sm:$0xff] %v161
    $region29: #{tpu_custom_call.1} parent=1 // pred_fallthru
      _
    // Predicated region
    $region30: #{tpu_custom_call.1} parent=1 // pred_check
      _
    $region31: #{tpu_custom_call.1} parent=1 // pred_check_branch
      %165 = sbr.rel (0) target = $region33
    $region32: #{tpu_custom_call.1} parent=1 // pred_region
      %s167 = ssub.s32 256, 256
      %168 = vsyncadd [#allocation5], %s167
      %s169 = sshll.u32 [#allocation8], 4
      %s170 = int_to_ptr.vmem [resolvable:$true] %s169
      %175 = dma.vmem_to_hbm [thread:$0]  %s170, 256, %s3, [#allocation5], 128, 128, 8
    $region33: #{tpu_custom_call.1} parent=1 // pred_fallthru
      _
    // Predicated region
    $region34: #{tpu_custom_call.1} parent=1 // pred_check
      _
    $region35: #{tpu_custom_call.1} parent=1 // pred_check_branch
      %177 = sbr.rel (0) target = $region37
    $region36: #{tpu_custom_call.1} parent=1 // pred_region
      %178 = dma.done [#allocation5], 256
    $region37: #{tpu_custom_call.1} parent=1 // pred_fallthru
      _
    %179 = vsyncpa [#allocation4], 1
    %180 = vsyncpa [#allocation7], 1
    %181 = vsyncpa [#allocation5], 1

</llo_original>
